<compile_context>
chip_gen: v5e
topology: v5e:2x2
jax: 0.10.0
libtpu: 0.0.40
codegen_flags: <defaults>
</compile_context>

<pallas_src>
import functools
import math

import numpy as np

import jax
import jax.numpy as jnp
from jax.experimental import pallas as pl
from jax.experimental.pallas import tpu as pltpu

_N_LAYERS = 5
_TOTAL_STRIDE = 2 ** _N_LAYERS          # 32
# Layers [0, _N_DENSE): deferred decimation on the full lane slab (channels
# are small, lanes stay 128-dense, shift = roll+mask).  Layers [_N_DENSE, 5):
# big channel counts -> im2col gathers, lane count halves per layer.
_N_DENSE = 3


def _round_up(x, m):
    return (x + m - 1) // m * m


# ---------------------------------------------------------------------------
# Fused Pallas kernel: whole 5-layer encoder in one invocation
# ---------------------------------------------------------------------------
def _fused_encoder_kernel(*refs, n_layers, n_dense, t_in):
    # refs = (x, w_0..w_{L-1}, d_even/d_odd per im2col layer, out)
    #   x    : (Cin_pad0, N*T)          lane-dense f32 input slab
    #   w_l  : (Cout_pad, 2*Cin_pad+8)  bf16 fused taps+bias  [W1 | W0 | b]
    #   d_*  : 0/1 bf16 gather matrices for the im2col layers
    #   out  : (Cout_pad_last, N*T/32)  f32
    f32, bf16 = jnp.float32, jnp.bfloat16
    x_ref = refs[0]
    w_refs = refs[1:1 + n_layers]
    g_refs = refs[1 + n_layers:1 + n_layers + 2 * (n_layers - n_dense)]
    o_ref = refs[-1]

    z = x_ref[...]                      # (ci_pad0, N*t_in) f32, lane-dense
    t_len = t_in                        # per-sample lane count of z
    stride_v = 1                        # lane stride of valid samples in z

    for l in range(n_layers):
        if l < n_dense:
            # Causal shift by stride_v lanes: XLU roll + per-sample zero mask
            # (mask kills both the circular wrap and cross-sample leakage).
            rolled = pltpu.roll(z, shift=stride_v, axis=1)
            lane = jax.lax.broadcasted_iota(jnp.int32, z.shape, 1)
            z_sh = jnp.where((lane % t_len) >= stride_v, rolled, 0.0)
            even, odd = z, z_sh
            l_out = z.shape[1]
            stride_v *= 2               # outputs valid every 2*stride_v lanes
        else:
            # im2col for k=2/s=2: gather x[2t] / x[2t-1] streams with tiny
            # constant 0/1 matmuls; output lanes are dense (no garbage lanes).
            gi = 2 * (l - n_dense)
            zb = z.astype(bf16)
            even = jnp.dot(zb, g_refs[gi][...], preferred_element_type=f32)
            odd = jnp.dot(zb, g_refs[gi + 1][...], preferred_element_type=f32)
            l_out = even.shape[1]
            t_len = t_len // (2 * stride_v)
            stride_v = 1

        # Fused taps + folded bias: y = [W1 | W0 | b] @ [z ; z_shift ; onehot].
        ones_blk = (jax.lax.broadcasted_iota(jnp.int32, (8, l_out), 0) == 0
                    ).astype(f32)
        zcat = jnp.concatenate([even, odd, ones_blk], axis=0).astype(bf16)
        y = jnp.dot(w_refs[l][...], zcat, preferred_element_type=f32)
        z = jnp.maximum(y, 0.1 * y)     # LeakyReLU(0.1), single VPU max

    o_ref[...] = z                      # (co_pad_last, N*t_in//32)


# ---------------------------------------------------------------------------
# One-time host-side preparation
# ---------------------------------------------------------------------------
def prepare_params(params, dtype=jnp.bfloat16):
    """Repack PyTorch (Cout, Cin, 2) conv weights + bias once.

    Each layer becomes a single fused matmul  y = Wf @ [z ; z_shift ; onehot]
    with Wf = [W[:,:,1] | W[:,:,0] | b], channel extents padded to multiples
    of 8 (padded rows/cols are exact zeros and ride along harmlessly)."""
    cins = tuple(int(w.shape[1]) for w, _ in params)
    couts = tuple(int(w.shape[0]) for w, _ in params)
    w_fused = []
    for (w, b), ci, co in zip(params, cins, couts):
        ci_p, co_p = _round_up(ci, 8), _round_up(co, 8)
        wf = np.zeros((co_p, 2 * ci_p + 8), np.float32)
        w_np = np.asarray(w, np.float32)
        wf[:co, :ci] = w_np[:, :, 1]                    # tap on x[2t]
        wf[:co, ci_p:ci_p + ci] = w_np[:, :, 0]         # tap on x[2t-1] (causal)
        wf[:co, 2 * ci_p] = np.asarray(b, np.float32)   # bias column
        w_fused.append(jnp.asarray(wf, dtype))
    return {"w": tuple(w_fused), "cins": cins, "couts": couts}


def _build_im2col_gathers(n_batch, t_in, n_layers=_N_LAYERS, n_dense=_N_DENSE,
                          dtype=jnp.bfloat16):
    """0/1 matrices gathering the x[2t] / x[2t-1] streams for the im2col
    layers (per-sample causal: the t==0 column of the odd matrix is zero)."""
    mats = []
    t_len, stride_v = t_in, 2 ** n_dense
    for _ in range(n_dense, n_layers):
        t_out = t_len // (2 * stride_v)
        l_in, l_out = n_batch * t_len, n_batch * t_out
        d_even = np.zeros((l_in, l_out), np.float32)
        d_odd = np.zeros((l_in, l_out), np.float32)
        for s in range(n_batch):
            for t in range(t_out):
                d_even[s * t_len + 2 * t * stride_v, s * t_out + t] = 1.0
                if t > 0:
                    d_odd[s * t_len + (2 * t - 1) * stride_v, s * t_out + t] = 1.0
        mats += [jnp.asarray(d_even, dtype), jnp.asarray(d_odd, dtype)]
        t_len, stride_v = t_out, 1
    return mats


# ---------------------------------------------------------------------------
# ForceEncoder forward (fused Pallas) + pure-JAX reference
# ---------------------------------------------------------------------------
def force_encoder_pallas(force_nct, packed):
    n, c_in, t_in = force_nct.shape
    cins, couts = packed["cins"], packed["couts"]
    assert c_in == cins[0], (c_in, cins[0])
    assert t_in % _TOTAL_STRIDE == 0, "T must be divisible by 2**5 = 32"
    t_out = t_in // _TOTAL_STRIDE
    ci_p0 = _round_up(cins[0], 8)
    co_pl = _round_up(couts[-1], 8)

    # Lane-dense entry slab (Cin_pad, N*T): wrapper-side layout plumbing.
    x = jnp.transpose(force_nct, (1, 0, 2)).reshape(c_in, n * t_in)
    if ci_p0 > c_in:
        x = jnp.pad(x, ((0, ci_p0 - c_in), (0, 0)))

    gathers = _build_im2col_gathers(n, t_in)
    kernel = functools.partial(_fused_encoder_kernel, n_layers=_N_LAYERS,
                               n_dense=_N_DENSE, t_in=t_in)
    out_slab = pl.pallas_call(
        kernel,
        out_shape=jax.ShapeDtypeStruct((co_pl, n * t_out), jnp.float32),
        compiler_params=pltpu.CompilerParams(
            vmem_limit_bytes=32 * 1024 * 1024),
    )(x, *packed["w"], *gathers)

    # Lane-dense exit slab -> PyTorch (N, Cout, T_out) layout.
    out = out_slab[:couts[-1]].reshape(couts[-1], n, t_out)
    return jnp.transpose(out, (1, 0, 2))


def _causal_conv_ref(x_nct, w, b):
    out = jax.lax.conv_general_dilated(
        x_nct, w, window_strides=(2,), padding=[(1, 1)],
        dimension_numbers=("NCH", "OIH", "NCH"))
    out = out + b[None, :, None]
    out = out[:, :, :-1]                                # drop trailing pad
    return jnp.where(out > 0, out, 0.1 * out)


def force_encoder_ref(force_nct, params):
    x = force_nct
    for w, b in params:
        x = _causal_conv_ref(x, w, b)
    return x


# ---------------------------------------------------------------------------
# Deterministic parameter init (shapes from ForceEncoder.__init__)
# ---------------------------------------------------------------------------
def init_params(key, z_dim, z_depth):
    chans = [6, 16, 32, 64, 128, z_depth * z_dim]
    params = []
    for i in range(_N_LAYERS):
        key, k1, k2 = jax.random.split(key, 3)
        cin, cout = chans[i], chans[i + 1]
        std = math.sqrt(2.0 / (cin * 2))                # kaiming-like
        w = jax.random.normal(k1, (cout, cin, 2), jnp.float32) * std
        b = jax.random.normal(k2, (cout,), jnp.float32) * 0.01
        params.append((w, b))
    return params


if __name__ == "__main__":
    z_dim, z_depth = 8, 2
    N, C, T = 2, 6, 64                                  # T divisible by 32

    key = jax.random.PRNGKey(0)
    key, kp, kx = jax.random.split(key, 3)
    params = init_params(kp, z_dim, z_depth)
    packed = prepare_params(params)                     # one-time host repack
    force = jax.random.normal(kx, (N, C, T), jnp.float32)

    out = jax.block_until_ready(force_encoder_pallas(force, packed))
    ref = jax.block_until_ready(force_encoder_ref(force, params))

    assert out.shape == (N, z_depth * z_dim, T // 32), out.shape
    # bf16 MXU operands with f32 accumulation: compare at bf16-level tolerance.
    assert jnp.allclose(out, ref, atol=5e-2, rtol=5e-2), (
        float(jnp.max(jnp.abs(out - ref))))

    print("KERNEL_OK")
</pallas_src>

<mosaic_0001>
module attributes {stable_mosaic.version = 11 : i64} {
  func.func @_fused_encoder_kernel(%arg0: memref<8x128xf32, #tpu.memory_space<vmem>>, %arg1: memref<16x24xbf16, #tpu.memory_space<vmem>>, %arg2: memref<32x40xbf16, #tpu.memory_space<vmem>>, %arg3: memref<64x72xbf16, #tpu.memory_space<vmem>>, %arg4: memref<128x136xbf16, #tpu.memory_space<vmem>>, %arg5: memref<16x264xbf16, #tpu.memory_space<vmem>>, %arg6: memref<128x8xbf16, #tpu.memory_space<vmem>>, %arg7: memref<128x8xbf16, #tpu.memory_space<vmem>>, %arg8: memref<8x4xbf16, #tpu.memory_space<vmem>>, %arg9: memref<8x4xbf16, #tpu.memory_space<vmem>>, %arg10: memref<16x4xf32, #tpu.memory_space<vmem>>) attributes {dimension_semantics = [], scalar_prefetch = 0 : i64, scratch_operands = 0 : i64, tpu.core_type = #tpu.core_type<tc>} {
    %c0 = arith.constant 0 : index
    %c0_0 = arith.constant 0 : index
    %0 = vector.load %arg0[%c0, %c0_0] : memref<8x128xf32, #tpu.memory_space<vmem>>, vector<8x128xf32>
    %c1_i32 = arith.constant 1 : i32
    %1 = tpu.dynamic_rotate %0 by %c1_i32 dim 1 : vector<8x128xf32>, i32 -> vector<8x128xf32>
    %2 = tpu.iota {dimensions = array<i32: 1>} : vector<8x128xi32>
    %c64_i32 = arith.constant 64 : i32
    %c0_i32 = arith.constant 0 : i32
    %3 = arith.cmpi eq, %c64_i32, %c0_i32 : i32
    %c1_i32_1 = arith.constant 1 : i32
    %4 = arith.select %3, %c1_i32_1, %c64_i32 : i32
    %5 = vector.broadcast %4 : i32 to vector<8x128xi32>
    %6 = arith.remsi %2, %5 : vector<8x128xi32>
    %c0_i32_2 = arith.constant 0 : i32
    %7 = vector.broadcast %c0_i32_2 : i32 to vector<8x128xi32>
    %8 = arith.cmpi ne, %6, %7 : vector<8x128xi32>
    %c0_i32_3 = arith.constant 0 : i32
    %9 = vector.broadcast %c0_i32_3 : i32 to vector<8x128xi32>
    %10 = arith.cmpi slt, %6, %9 : vector<8x128xi32>
    %c0_i32_4 = arith.constant 0 : i32
    %11 = arith.cmpi slt, %4, %c0_i32_4 : i32
    %12 = vector.broadcast %11 : i1 to vector<8x128xi1>
    %13 = vector.broadcast %12 : vector<8x128xi1> to vector<8x128xi1>
    %14 = arith.xori %10, %13 : vector<8x128xi1>
    %15 = arith.andi %14, %8 : vector<8x128xi1>
    %16 = vector.broadcast %4 : i32 to vector<8x128xi32>
    %17 = arith.addi %6, %16 : vector<8x128xi32>
    %18 = arith.select %15, %17, %6 : vector<8x128xi1>, vector<8x128xi32>
    %c1_i32_5 = arith.constant 1 : i32
    %19 = vector.broadcast %c1_i32_5 : i32 to vector<8x128xi32>
    %20 = arith.cmpi sge, %18, %19 : vector<8x128xi32>
    %cst = arith.constant 0.000000e+00 : f32
    %21 = vector.broadcast %cst : f32 to vector<8x128xf32>
    %22 = arith.select %20, %1, %21 : vector<8x128xi1>, vector<8x128xf32>
    %23 = tpu.iota {dimensions = array<i32: 0>} : vector<8x128xi32>
    %c0_i32_6 = arith.constant 0 : i32
    %24 = vector.broadcast %c0_i32_6 : i32 to vector<8x128xi32>
    %25 = arith.cmpi eq, %23, %24 : vector<8x128xi32>
    %26 = arith.extui %25 : vector<8x128xi1> to vector<8x128xi32>
    %27 = arith.sitofp %26 : vector<8x128xi32> to vector<8x128xf32>
    %28 = tpu.concatenate %0, %22, %27 in 0 : vector<8x128xf32>, vector<8x128xf32>, vector<8x128xf32> -> vector<24x128xf32>
    %29 = arith.truncf %28 : vector<24x128xf32> to vector<24x128xbf16>
    %c0_7 = arith.constant 0 : index
    %c0_8 = arith.constant 0 : index
    %30 = vector.load %arg1[%c0_7, %c0_8] : memref<16x24xbf16, #tpu.memory_space<vmem>>, vector<16x24xbf16>
    %cst_9 = arith.constant dense<0.000000e+00> : vector<16x128xf32>
    %31 = tpu.matmul %30, %29, %cst_9 {dimension_numbers = #tpu.dot_dimension_numbers<[1], [0], [0], [1], [0, 0, 1, 1], [], []>} : vector<16x24xbf16>, vector<24x128xbf16>, vector<16x128xf32> -> vector<16x128xf32>
    %cst_10 = arith.constant 1.000000e-01 : f32
    %32 = vector.broadcast %cst_10 : f32 to vector<16x128xf32>
    %33 = arith.mulf %32, %31 : vector<16x128xf32>
    %34 = arith.maximumf %31, %33 : vector<16x128xf32>
    %c2_i32 = arith.constant 2 : i32
    %35 = tpu.dynamic_rotate %34 by %c2_i32 dim 1 : vector<16x128xf32>, i32 -> vector<16x128xf32>
    %36 = tpu.iota {dimensions = array<i32: 1>} : vector<16x128xi32>
    %c64_i32_11 = arith.constant 64 : i32
    %c0_i32_12 = arith.constant 0 : i32
    %37 = arith.cmpi eq, %c64_i32_11, %c0_i32_12 : i32
    %c1_i32_13 = arith.constant 1 : i32
    %38 = arith.select %37, %c1_i32_13, %c64_i32_11 : i32
    %39 = vector.broadcast %38 : i32 to vector<16x128xi32>
    %40 = arith.remsi %36, %39 : vector<16x128xi32>
    %c0_i32_14 = arith.constant 0 : i32
    %41 = vector.broadcast %c0_i32_14 : i32 to vector<16x128xi32>
    %42 = arith.cmpi ne, %40, %41 : vector<16x128xi32>
    %c0_i32_15 = arith.constant 0 : i32
    %43 = vector.broadcast %c0_i32_15 : i32 to vector<16x128xi32>
    %44 = arith.cmpi slt, %40, %43 : vector<16x128xi32>
    %c0_i32_16 = arith.constant 0 : i32
    %45 = arith.cmpi slt, %38, %c0_i32_16 : i32
    %46 = vector.broadcast %45 : i1 to vector<16x128xi1>
    %47 = vector.broadcast %46 : vector<16x128xi1> to vector<16x128xi1>
    %48 = arith.xori %44, %47 : vector<16x128xi1>
    %49 = arith.andi %48, %42 : vector<16x128xi1>
    %50 = vector.broadcast %38 : i32 to vector<16x128xi32>
    %51 = arith.addi %40, %50 : vector<16x128xi32>
    %52 = arith.select %49, %51, %40 : vector<16x128xi1>, vector<16x128xi32>
    %c2_i32_17 = arith.constant 2 : i32
    %53 = vector.broadcast %c2_i32_17 : i32 to vector<16x128xi32>
    %54 = arith.cmpi sge, %52, %53 : vector<16x128xi32>
    %cst_18 = arith.constant 0.000000e+00 : f32
    %55 = vector.broadcast %cst_18 : f32 to vector<16x128xf32>
    %56 = arith.select %54, %35, %55 : vector<16x128xi1>, vector<16x128xf32>
    %57 = tpu.iota {dimensions = array<i32: 0>} : vector<8x128xi32>
    %c0_i32_19 = arith.constant 0 : i32
    %58 = vector.broadcast %c0_i32_19 : i32 to vector<8x128xi32>
    %59 = arith.cmpi eq, %57, %58 : vector<8x128xi32>
    %60 = arith.extui %59 : vector<8x128xi1> to vector<8x128xi32>
    %61 = arith.sitofp %60 : vector<8x128xi32> to vector<8x128xf32>
    %62 = tpu.concatenate %34, %56, %61 in 0 : vector<16x128xf32>, vector<16x128xf32>, vector<8x128xf32> -> vector<40x128xf32>
    %63 = arith.truncf %62 : vector<40x128xf32> to vector<40x128xbf16>
    %c0_20 = arith.constant 0 : index
    %c0_21 = arith.constant 0 : index
    %64 = vector.load %arg2[%c0_20, %c0_21] : memref<32x40xbf16, #tpu.memory_space<vmem>>, vector<32x40xbf16>
    %cst_22 = arith.constant dense<0.000000e+00> : vector<32x128xf32>
    %65 = tpu.matmul %64, %63, %cst_22 {dimension_numbers = #tpu.dot_dimension_numbers<[1], [0], [0], [1], [0, 0, 1, 1], [], []>} : vector<32x40xbf16>, vector<40x128xbf16>, vector<32x128xf32> -> vector<32x128xf32>
    %cst_23 = arith.constant 1.000000e-01 : f32
    %66 = vector.broadcast %cst_23 : f32 to vector<32x128xf32>
    %67 = arith.mulf %66, %65 : vector<32x128xf32>
    %68 = arith.maximumf %65, %67 : vector<32x128xf32>
    %c4_i32 = arith.constant 4 : i32
    %69 = tpu.dynamic_rotate %68 by %c4_i32 dim 1 : vector<32x128xf32>, i32 -> vector<32x128xf32>
    %70 = tpu.iota {dimensions = array<i32: 1>} : vector<32x128xi32>
    %c64_i32_24 = arith.constant 64 : i32
    %c0_i32_25 = arith.constant 0 : i32
    %71 = arith.cmpi eq, %c64_i32_24, %c0_i32_25 : i32
    %c1_i32_26 = arith.constant 1 : i32
    %72 = arith.select %71, %c1_i32_26, %c64_i32_24 : i32
    %73 = vector.broadcast %72 : i32 to vector<32x128xi32>
    %74 = arith.remsi %70, %73 : vector<32x128xi32>
    %c0_i32_27 = arith.constant 0 : i32
    %75 = vector.broadcast %c0_i32_27 : i32 to vector<32x128xi32>
    %76 = arith.cmpi ne, %74, %75 : vector<32x128xi32>
    %c0_i32_28 = arith.constant 0 : i32
    %77 = vector.broadcast %c0_i32_28 : i32 to vector<32x128xi32>
    %78 = arith.cmpi slt, %74, %77 : vector<32x128xi32>
    %c0_i32_29 = arith.constant 0 : i32
    %79 = arith.cmpi slt, %72, %c0_i32_29 : i32
    %80 = vector.broadcast %79 : i1 to vector<32x128xi1>
    %81 = vector.broadcast %80 : vector<32x128xi1> to vector<32x128xi1>
    %82 = arith.xori %78, %81 : vector<32x128xi1>
    %83 = arith.andi %82, %76 : vector<32x128xi1>
    %84 = vector.broadcast %72 : i32 to vector<32x128xi32>
    %85 = arith.addi %74, %84 : vector<32x128xi32>
    %86 = arith.select %83, %85, %74 : vector<32x128xi1>, vector<32x128xi32>
    %c4_i32_30 = arith.constant 4 : i32
    %87 = vector.broadcast %c4_i32_30 : i32 to vector<32x128xi32>
    %88 = arith.cmpi sge, %86, %87 : vector<32x128xi32>
    %cst_31 = arith.constant 0.000000e+00 : f32
    %89 = vector.broadcast %cst_31 : f32 to vector<32x128xf32>
    %90 = arith.select %88, %69, %89 : vector<32x128xi1>, vector<32x128xf32>
    %91 = tpu.iota {dimensions = array<i32: 0>} : vector<8x128xi32>
    %c0_i32_32 = arith.constant 0 : i32
    %92 = vector.broadcast %c0_i32_32 : i32 to vector<8x128xi32>
    %93 = arith.cmpi eq, %91, %92 : vector<8x128xi32>
    %94 = arith.extui %93 : vector<8x128xi1> to vector<8x128xi32>
    %95 = arith.sitofp %94 : vector<8x128xi32> to vector<8x128xf32>
    %96 = tpu.concatenate %68, %90, %95 in 0 : vector<32x128xf32>, vector<32x128xf32>, vector<8x128xf32> -> vector<72x128xf32>
    %97 = arith.truncf %96 : vector<72x128xf32> to vector<72x128xbf16>
    %c0_33 = arith.constant 0 : index
    %c0_34 = arith.constant 0 : index
    %98 = vector.load %arg3[%c0_33, %c0_34] : memref<64x72xbf16, #tpu.memory_space<vmem>>, vector<64x72xbf16>
    %cst_35 = arith.constant dense<0.000000e+00> : vector<64x128xf32>
    %99 = tpu.matmul %98, %97, %cst_35 {dimension_numbers = #tpu.dot_dimension_numbers<[1], [0], [0], [1], [0, 0, 1, 1], [], []>} : vector<64x72xbf16>, vector<72x128xbf16>, vector<64x128xf32> -> vector<64x128xf32>
    %cst_36 = arith.constant 1.000000e-01 : f32
    %100 = vector.broadcast %cst_36 : f32 to vector<64x128xf32>
    %101 = arith.mulf %100, %99 : vector<64x128xf32>
    %102 = arith.maximumf %99, %101 : vector<64x128xf32>
    %103 = arith.truncf %102 : vector<64x128xf32> to vector<64x128xbf16>
    %c0_37 = arith.constant 0 : index
    %c0_38 = arith.constant 0 : index
    %104 = vector.load %arg6[%c0_37, %c0_38] : memref<128x8xbf16, #tpu.memory_space<vmem>>, vector<128x8xbf16>
    %cst_39 = arith.constant dense<0.000000e+00> : vector<64x8xf32>
    %105 = tpu.matmul %103, %104, %cst_39 {dimension_numbers = #tpu.dot_dimension_numbers<[1], [0], [0], [1], [0, 0, 1, 1], [], []>} : vector<64x128xbf16>, vector<128x8xbf16>, vector<64x8xf32> -> vector<64x8xf32>
    %c0_40 = arith.constant 0 : index
    %c0_41 = arith.constant 0 : index
    %106 = vector.load %arg7[%c0_40, %c0_41] : memref<128x8xbf16, #tpu.memory_space<vmem>>, vector<128x8xbf16>
    %cst_42 = arith.constant dense<0.000000e+00> : vector<64x8xf32>
    %107 = tpu.matmul %103, %106, %cst_42 {dimension_numbers = #tpu.dot_dimension_numbers<[1], [0], [0], [1], [0, 0, 1, 1], [], []>} : vector<64x128xbf16>, vector<128x8xbf16>, vector<64x8xf32> -> vector<64x8xf32>
    %108 = tpu.iota {dimensions = array<i32: 0>} : vector<8x8xi32>
    %c0_i32_43 = arith.constant 0 : i32
    %109 = vector.broadcast %c0_i32_43 : i32 to vector<8x8xi32>
    %110 = arith.cmpi eq, %108, %109 : vector<8x8xi32>
    %111 = arith.extui %110 : vector<8x8xi1> to vector<8x8xi32>
    %112 = arith.sitofp %111 : vector<8x8xi32> to vector<8x8xf32>
    %113 = tpu.concatenate %105, %107, %112 in 0 : vector<64x8xf32>, vector<64x8xf32>, vector<8x8xf32> -> vector<136x8xf32>
    %114 = arith.truncf %113 : vector<136x8xf32> to vector<136x8xbf16>
    %c0_44 = arith.constant 0 : index
    %c0_45 = arith.constant 0 : index
    %115 = vector.load %arg4[%c0_44, %c0_45] : memref<128x136xbf16, #tpu.memory_space<vmem>>, vector<128x136xbf16>
    %cst_46 = arith.constant dense<0.000000e+00> : vector<128x8xf32>
    %116 = tpu.matmul %115, %114, %cst_46 {dimension_numbers = #tpu.dot_dimension_numbers<[1], [0], [0], [1], [0, 0, 1, 1], [], []>} : vector<128x136xbf16>, vector<136x8xbf16>, vector<128x8xf32> -> vector<128x8xf32>
    %cst_47 = arith.constant 1.000000e-01 : f32
    %117 = vector.broadcast %cst_47 : f32 to vector<128x8xf32>
    %118 = arith.mulf %117, %116 : vector<128x8xf32>
    %119 = arith.maximumf %116, %118 : vector<128x8xf32>
    %120 = arith.truncf %119 : vector<128x8xf32> to vector<128x8xbf16>
    %c0_48 = arith.constant 0 : index
    %c0_49 = arith.constant 0 : index
    %121 = vector.load %arg8[%c0_48, %c0_49] : memref<8x4xbf16, #tpu.memory_space<vmem>>, vector<8x4xbf16>
    %cst_50 = arith.constant dense<0.000000e+00> : vector<128x4xf32>
    %122 = tpu.matmul %120, %121, %cst_50 {dimension_numbers = #tpu.dot_dimension_numbers<[1], [0], [0], [1], [0, 0, 1, 1], [], []>} : vector<128x8xbf16>, vector<8x4xbf16>, vector<128x4xf32> -> vector<128x4xf32>
    %c0_51 = arith.constant 0 : index
    %c0_52 = arith.constant 0 : index
    %123 = vector.load %arg9[%c0_51, %c0_52] : memref<8x4xbf16, #tpu.memory_space<vmem>>, vector<8x4xbf16>
    %cst_53 = arith.constant dense<0.000000e+00> : vector<128x4xf32>
    %124 = tpu.matmul %120, %123, %cst_53 {dimension_numbers = #tpu.dot_dimension_numbers<[1], [0], [0], [1], [0, 0, 1, 1], [], []>} : vector<128x8xbf16>, vector<8x4xbf16>, vector<128x4xf32> -> vector<128x4xf32>
    %125 = tpu.iota {dimensions = array<i32: 0>} : vector<8x4xi32>
    %c0_i32_54 = arith.constant 0 : i32
    %126 = vector.broadcast %c0_i32_54 : i32 to vector<8x4xi32>
    %127 = arith.cmpi eq, %125, %126 : vector<8x4xi32>
    %128 = arith.extui %127 : vector<8x4xi1> to vector<8x4xi32>
    %129 = arith.sitofp %128 : vector<8x4xi32> to vector<8x4xf32>
    %130 = tpu.concatenate %122, %124, %129 in 0 : vector<128x4xf32>, vector<128x4xf32>, vector<8x4xf32> -> vector<264x4xf32>
    %131 = arith.truncf %130 : vector<264x4xf32> to vector<264x4xbf16>
    %c0_55 = arith.constant 0 : index
    %c0_56 = arith.constant 0 : index
    %132 = vector.load %arg5[%c0_55, %c0_56] : memref<16x264xbf16, #tpu.memory_space<vmem>>, vector<16x264xbf16>
    %cst_57 = arith.constant dense<0.000000e+00> : vector<16x4xf32>
    %133 = tpu.matmul %132, %131, %cst_57 {dimension_numbers = #tpu.dot_dimension_numbers<[1], [0], [0], [1], [0, 0, 1, 1], [], []>} : vector<16x264xbf16>, vector<264x4xbf16>, vector<16x4xf32> -> vector<16x4xf32>
    %cst_58 = arith.constant 1.000000e-01 : f32
    %134 = vector.broadcast %cst_58 : f32 to vector<16x4xf32>
    %135 = arith.mulf %134, %133 : vector<16x4xf32>
    %136 = arith.maximumf %133, %135 : vector<16x4xf32>
    %c0_59 = arith.constant 0 : index
    %c0_60 = arith.constant 0 : index
    %137 = vector.load %arg10[%c0_59, %c0_60] : memref<16x4xf32, #tpu.memory_space<vmem>>, vector<16x4xf32>
    tpu.vector_store %arg10[%c0_59, %c0_60], %136 {strides = array<i32>} : memref<16x4xf32, #tpu.memory_space<vmem>>, vector<16x4xf32>,
    return
  }
}

</mosaic_0001>

<llo_original>
// kernel: tpu_custom_call.1
$region0: #{tpu_custom_call.1}
  #allocation0 [shape = 'u32[]', space=smem, size = 0x4, offset = 0x4, fixed_abs, tag = 'smem constant byte address 0x4 - core index']
  #allocation1 [shape = 'u32[72,128]{1,0:T(1,128)}', space=vmem, size = 0x9000, scoped, tag = 'internal scratch']
  %s0 = inlined_call_operand.vmem [shape: f32[8,128], index: 0, kind: input, shape index: {}]
  %s1 = inlined_call_operand.vmem [shape: bf16[16,24], index: 1, kind: input, shape index: {}]
  %s2 = inlined_call_operand.vmem [shape: bf16[32,40], index: 2, kind: input, shape index: {}]
  %s3 = inlined_call_operand.vmem [shape: bf16[64,72], index: 3, kind: input, shape index: {}]
  %s4 = inlined_call_operand.vmem [shape: bf16[128,136], index: 4, kind: input, shape index: {}]
  %s5 = inlined_call_operand.vmem [shape: bf16[16,264], index: 5, kind: input, shape index: {}]
  %s6 = inlined_call_operand.vmem [shape: bf16[128,8], index: 6, kind: input, shape index: {}]
  %s7 = inlined_call_operand.vmem [shape: bf16[128,8], index: 7, kind: input, shape index: {}]
  %s8 = inlined_call_operand.vmem [shape: bf16[8,4], index: 8, kind: input, shape index: {}]
  %s9 = inlined_call_operand.vmem [shape: bf16[8,4], index: 9, kind: input, shape index: {}]
  %s10 = inlined_call_operand.vmem [shape: f32[16,4], index: 10, kind: output, shape index: {}]
  %s11 = sld [smem:[#allocation0]]
  $region50: #{tpu_custom_call.1} parent=0
    _
  %s13 = ssub.s32 1, %s11
  %s14 = scalar_select 0, %s13, %s11
  // Predicated region
  $region2: #{tpu_custom_call.1} parent=0 // pred_check
    _
  $region3: #{tpu_custom_call.1} parent=0 // pred_check_branch
    %16 = sbr.rel (0) target = $region5
  $region4: #{tpu_custom_call.1} parent=0 // pred_region
    _
  $region5: #{tpu_custom_call.1} parent=0 // pred_fallthru
    _
  // Predicated region
  $region6: #{tpu_custom_call.1} parent=0 // pred_check
    _
  $region7: #{tpu_custom_call.1} parent=0 // pred_check_branch
    %18 = sbr.rel (0) target = $region9
  $region8: #{tpu_custom_call.1} parent=0 // pred_region
    _
  $region9: #{tpu_custom_call.1} parent=0 // pred_fallthru
    _
  // Predicated region
  $region10: #{tpu_custom_call.1} parent=0 // pred_check
    _
  $region11: #{tpu_custom_call.1} parent=0 // pred_check_branch
    %20 = sbr.rel (0) target = $region13
  $region12: #{tpu_custom_call.1} parent=0 // pred_region
    _
  $region13: #{tpu_custom_call.1} parent=0 // pred_fallthru
    _
  // Predicated region
  $region14: #{tpu_custom_call.1} parent=0 // pred_check
    _
  $region15: #{tpu_custom_call.1} parent=0 // pred_check_branch
    %22 = sbr.rel (0) target = $region17
  $region16: #{tpu_custom_call.1} parent=0 // pred_region
    _
  $region17: #{tpu_custom_call.1} parent=0 // pred_fallthru
    _
  // Predicated region
  $region18: #{tpu_custom_call.1} parent=0 // pred_check
    _
  $region19: #{tpu_custom_call.1} parent=0 // pred_check_branch
    %24 = sbr.rel (0) target = $region21
  $region20: #{tpu_custom_call.1} parent=0 // pred_region
    _
  $region21: #{tpu_custom_call.1} parent=0 // pred_fallthru
    _
  // Predicated region
  $region22: #{tpu_custom_call.1} parent=0 // pred_check
    _
  $region23: #{tpu_custom_call.1} parent=0 // pred_check_branch
    %26 = sbr.rel (0) target = $region25
  $region24: #{tpu_custom_call.1} parent=0 // pred_region
    _
  $region25: #{tpu_custom_call.1} parent=0 // pred_fallthru
    _
  // Predicated region
  $region26: #{tpu_custom_call.1} parent=0 // pred_check
    _
  $region27: #{tpu_custom_call.1} parent=0 // pred_check_branch
    %28 = sbr.rel (0) target = $region29
  $region28: #{tpu_custom_call.1} parent=0 // pred_region
    _
  $region29: #{tpu_custom_call.1} parent=0 // pred_fallthru
    _
  // Predicated region
  $region30: #{tpu_custom_call.1} parent=0 // pred_check
    _
  $region31: #{tpu_custom_call.1} parent=0 // pred_check_branch
    %30 = sbr.rel (0) target = $region33
  $region32: #{tpu_custom_call.1} parent=0 // pred_region
    _
  $region33: #{tpu_custom_call.1} parent=0 // pred_fallthru
    _
  // Predicated region
  $region34: #{tpu_custom_call.1} parent=0 // pred_check
    _
  $region35: #{tpu_custom_call.1} parent=0 // pred_check_branch
    %32 = sbr.rel (0) target = $region37
  $region36: #{tpu_custom_call.1} parent=0 // pred_region
    _
  $region37: #{tpu_custom_call.1} parent=0 // pred_fallthru
    _
  // Predicated region
  $region38: #{tpu_custom_call.1} parent=0 // pred_check
    _
  $region39: #{tpu_custom_call.1} parent=0 // pred_check_branch
    %34 = sbr.rel (0) target = $region41
  $region40: #{tpu_custom_call.1} parent=0 // pred_region
    _
  $region41: #{tpu_custom_call.1} parent=0 // pred_fallthru
    _
  %v36 = vld [vmem:[%s0] sm:$0xff]
  %37 = vrot.lane.b32.xlu0 %v36, 1
  %v38 = vpop.permute.xlu0 %37
  %v39 = vlaneseq
  %v40 = vand.u32 %v39, 127
  %vm41 = vcmp.lt.s32.totalorder %v40, 0
  %v42 = vsub.s32 0, %v40
  %v43 = vsel %vm41, %v42, %v40
  %v44 = vshrl.u32 %v43, 6
  %v45 = vand.u32 %v43, 63
  %v46 = vsub.s32 0, %v45
  %v47 = vsel %vm41, %v46, %v45
  %vm48 = vcmp.ne.s32.totalorder %v47, 0
  %vm49 = vcmp.lt.s32.totalorder %v47, 0
  %vm50 = vmand %vm49, %vm48
  %v51 = vadd.s32 %v47, 64
  %v52 = vsel %vm50, %v51, %v47
  %vm53 = vcmp.ge.s32.totalorder %v52, 1
  %v54 = vsel %vm53, %v38, 0.0
  %v55 = vlaneseq
  %v56 = vshrl.u32 %v55, 7
  %vm57 = vcmp.eq.s32.totalorder %v56, 0
  %v58 = vsel %vm57, 1, 0
  %v59 = vcvt.s32.f32 %v58
  %v60 = vpack.c.bf16 %v54, %v36
  %v61 = vpack.c.bf16 %v59, %v59
  %v62 = vld [vmem:[%s1] sm:$0xf]
  %v63 = vld [vmem:[%s1 + $0x4] sm:$0xf]
  %v66 = vunpack.c.l.b16 %v62
  %v67 = vunpack.c.l.b16 %v63
  %v68 = vpack.c.b16 %v67, %v66
  %vm69 = vcmask 195584
  %v71 = vsel %vm69, %v68, 0
  %vm73 = vcmask 1043456
  %v75 = vsel %vm73, %v61, 0
  %77 = vmatpush.bf16.msra.mxu0 0
  %78 = vmatpush.bf16.msra.mxu0 0
  %79 = vmatpush.bf16.msra.mxu0 0
  %80 = vmatpush.bf16.msra.mxu0 0
  %81 = vmatpush.bf16.msra.mxu0 0
  %82 = vmatpush.bf16.msra.mxu0 0
  %83 = vmatpush.bf16.msra.mxu0 %v75
  %84 = vmatpush.bf16.msra.mxu0 %v60
  %85 = vmatmul.bf16.gmra.mxu0 %v71
  %v86 = vpop.f32.mrf.mxu0
  %v87 = vadd.f32 0.0, %v86
  %v88 = vpop.f32.mrf.mxu0
  %v89 = vadd.f32 0.0, %v88
  %90 = vdwg.mxu0
  %v91 = vmul.f32 %v87, 0.1
  %v92 = vmul.f32 %v89, 0.1
  %v93 = vmax.f32 %v87, %v91
  %v94 = vmax.f32 %v89, %v92
  %95 = vrot.lane.b32.xlu0 %v93, 2
  %v96 = vpop.permute.xlu0 %95
  %97 = vrot.lane.b32.xlu0 %v94, 2
  %v98 = vpop.permute.xlu0 %97
  %vm99 = vcmp.ge.s32.totalorder %v52, 2
  %v100 = vsel %vm99, %v96, 0.0
  %v101 = vsel %vm99, %v98, 0.0
  %v102 = vpack.c.bf16 %v94, %v93
  %v103 = vpack.c.bf16 %v101, %v100
  %v104 = vld [vmem:[%s2] sm:$0xf]
  %v105 = vld [vmem:[%s2 + $0x4] sm:$0xf]
  %v106 = vld [vmem:[%s2 + $0x8] sm:$0xf]
  %v107 = vld [vmem:[%s2 + $0xc] sm:$0xf]
  %v112 = vunpack.c.l.b16 %v104
  %v113 = vunpack.c.l.b16 %v105
  %v114 = vunpack.c.l.b16 %v106
  %v115 = vunpack.c.l.b16 %v107
  %v116 = vpack.c.b16 %v113, %v112
  %v117 = vpack.c.b16 %v115, %v114
  %vm118 = vcmask 326656
  %v120 = vsel %vm118, %v116, 0
  %v123 = vsel %vm118, %v117, 0
  %125 = vmatpush.bf16.msra.mxu0 0
  %126 = vmatpush.bf16.msra.mxu0 0
  %127 = vmatpush.bf16.msra.mxu0 0
  %128 = vmatpush.bf16.msra.mxu0 0
  %129 = vmatpush.bf16.msra.mxu0 0
  %130 = vmatpush.bf16.msra.mxu0 %v75
  %131 = vmatpush.bf16.msra.mxu0 %v103
  %132 = vmatpush.bf16.msra.mxu0 %v102
  %133 = vmatmul.bf16.gmra.mxu0 %v120
  %v134 = vpop.f32.mrf.mxu0
  %v135 = vadd.f32 0.0, %v134
  %v136 = vpop.f32.mrf.mxu0
  %v137 = vadd.f32 0.0, %v136
  %138 = vmatmul.bf16.gmra.mxu0 %v123
  %v139 = vpop.f32.mrf.mxu0
  %v140 = vadd.f32 0.0, %v139
  %v141 = vpop.f32.mrf.mxu0
  %v142 = vadd.f32 0.0, %v141
  %143 = vdwg.mxu0
  %v144 = vmul.f32 %v135, 0.1
  %v145 = vmul.f32 %v137, 0.1
  %v146 = vmul.f32 %v140, 0.1
  %v147 = vmul.f32 %v142, 0.1
  %v148 = vmax.f32 %v135, %v144
  %v149 = vmax.f32 %v137, %v145
  %v150 = vmax.f32 %v140, %v146
  %v151 = vmax.f32 %v142, %v147
  %152 = vrot.lane.b32.xlu0 %v148, 4
  %v153 = vpop.permute.xlu0 %152
  %154 = vrot.lane.b32.xlu0 %v149, 4
  %v155 = vpop.permute.xlu0 %154
  %156 = vrot.lane.b32.xlu0 %v150, 4
  %v157 = vpop.permute.xlu0 %156
  %158 = vrot.lane.b32.xlu0 %v151, 4
  %v159 = vpop.permute.xlu0 %158
  %vm160 = vcmp.ge.s32.totalorder %v52, 4
  %v161 = vsel %vm160, %v153, 0.0
  %v162 = vsel %vm160, %v155, 0.0
  %v163 = vsel %vm160, %v157, 0.0
  %v164 = vsel %vm160, %v159, 0.0
  %v165 = vpack.c.bf16 %v149, %v148
  %v166 = vpack.c.bf16 %v151, %v150
  %v167 = vpack.c.bf16 %v162, %v161
  %v168 = vpack.c.bf16 %v164, %v163
  %v169 = vld [vmem:[%s3] sm:$0xf]
  %v170 = vld [vmem:[%s3 + $0x4] sm:$0xf]
  %v171 = vld [vmem:[%s3 + $0x8] sm:$0xf]
  %v172 = vld [vmem:[%s3 + $0xc] sm:$0xf]
  %v173 = vld [vmem:[%s3 + $0x10] sm:$0xf]
  %v174 = vld [vmem:[%s3 + $0x14] sm:$0xf]
  %v175 = vld [vmem:[%s3 + $0x18] sm:$0xf]
  %v176 = vld [vmem:[%s3 + $0x1c] sm:$0xf]
  %v185 = vunpack.c.l.b16 %v169
  %v186 = vunpack.c.l.b16 %v170
  %v187 = vunpack.c.l.b16 %v171
  %v188 = vunpack.c.l.b16 %v172
  %v189 = vunpack.c.l.b16 %v173
  %v190 = vunpack.c.l.b16 %v174
  %v191 = vunpack.c.l.b16 %v175
  %v192 = vunpack.c.l.b16 %v176
  %v193 = vpack.c.b16 %v186, %v185
  %v194 = vpack.c.b16 %v188, %v187
  %v195 = vpack.c.b16 %v190, %v189
  %v196 = vpack.c.b16 %v192, %v191
  %vm197 = vcmask 588800
  %v199 = vsel %vm197, %v193, 0
  %v202 = vsel %vm197, %v194, 0
  %v205 = vsel %vm197, %v195, 0
  %v208 = vsel %vm197, %v196, 0
  %210 = vmatpush.bf16.msra.mxu0 0
  %211 = vmatpush.bf16.msra.mxu0 0
  %212 = vmatpush.bf16.msra.mxu0 0
  %213 = vmatpush.bf16.msra.mxu0 %v75
  %214 = vmatpush.bf16.msra.mxu0 %v168
  %215 = vmatpush.bf16.msra.mxu0 %v167
  %216 = vmatpush.bf16.msra.mxu0 %v166
  %217 = vmatpush.bf16.msra.mxu0 %v165
  %218 = vmatmul.bf16.gmra.mxu0 %v199
  %v219 = vpop.f32.mrf.mxu0
  %v220 = vadd.f32 0.0, %v219
  %v221 = vpop.f32.mrf.mxu0
  %v222 = vadd.f32 0.0, %v221
  %223 = vmatmul.bf16.gmra.mxu0 %v202
  %v224 = vpop.f32.mrf.mxu0
  %v225 = vadd.f32 0.0, %v224
  %v226 = vpop.f32.mrf.mxu0
  %v227 = vadd.f32 0.0, %v226
  %228 = vmatmul.bf16.gmra.mxu0 %v205
  %v229 = vpop.f32.mrf.mxu0
  %v230 = vadd.f32 0.0, %v229
  %v231 = vpop.f32.mrf.mxu0
  %v232 = vadd.f32 0.0, %v231
  %233 = vmatmul.bf16.gmra.mxu0 %v208
  %v234 = vpop.f32.mrf.mxu0
  %v235 = vadd.f32 0.0, %v234
  %v236 = vpop.f32.mrf.mxu0
  %v237 = vadd.f32 0.0, %v236
  %238 = vdwg.mxu0
  %v239 = vmul.f32 %v220, 0.1
  %v240 = vmul.f32 %v222, 0.1
  %v241 = vmul.f32 %v225, 0.1
  %v242 = vmul.f32 %v227, 0.1
  %v243 = vmul.f32 %v230, 0.1
  %v244 = vmul.f32 %v232, 0.1
  %v245 = vmul.f32 %v235, 0.1
  %v246 = vmul.f32 %v237, 0.1
  %v247 = vmax.f32 %v220, %v239
  %v248 = vmax.f32 %v222, %v240
  %v249 = vmax.f32 %v225, %v241
  %v250 = vmax.f32 %v227, %v242
  %v251 = vmax.f32 %v230, %v243
  %v252 = vmax.f32 %v232, %v244
  %v253 = vmax.f32 %v235, %v245
  %v254 = vmax.f32 %v237, %v246
  %v255 = vpack.c.bf16 %v248, %v247
  %v256 = vpack.c.bf16 %v250, %v249
  %v257 = vpack.c.bf16 %v252, %v251
  %v258 = vpack.c.bf16 %v254, %v253
  %v259 = vld [vmem:[%s6] sm:$0xf]
  %v260 = vld [vmem:[%s6 + $0x4] sm:$0xf]
  %v261 = vld [vmem:[%s6 + $0x8] sm:$0xf]
  %v262 = vld [vmem:[%s6 + $0xc] sm:$0xf]
  %v263 = vld [vmem:[%s6 + $0x10] sm:$0xf]
  %v264 = vld [vmem:[%s6 + $0x14] sm:$0xf]
  %v265 = vld [vmem:[%s6 + $0x18] sm:$0xf]
  %v266 = vld [vmem:[%s6 + $0x1c] sm:$0xf]
  %v267 = vld [vmem:[%s6 + $0x20] sm:$0xf]
  %v268 = vld [vmem:[%s6 + $0x24] sm:$0xf]
  %v269 = vld [vmem:[%s6 + $0x28] sm:$0xf]
  %v270 = vld [vmem:[%s6 + $0x2c] sm:$0xf]
  %v271 = vld [vmem:[%s6 + $0x30] sm:$0xf]
  %v272 = vld [vmem:[%s6 + $0x34] sm:$0xf]
  %v273 = vld [vmem:[%s6 + $0x38] sm:$0xf]
  %v274 = vld [vmem:[%s6 + $0x3c] sm:$0xf]
  %v291 = vunpack.c.l.b16 %v259
  %v292 = vunpack.c.l.b16 %v260
  %v293 = vunpack.c.l.b16 %v261
  %v294 = vunpack.c.l.b16 %v262
  %v295 = vunpack.c.l.b16 %v263
  %v296 = vunpack.c.l.b16 %v264
  %v297 = vunpack.c.l.b16 %v265
  %v298 = vunpack.c.l.b16 %v266
  %v299 = vunpack.c.l.b16 %v267
  %v300 = vunpack.c.l.b16 %v268
  %v301 = vunpack.c.l.b16 %v269
  %v302 = vunpack.c.l.b16 %v270
  %v303 = vunpack.c.l.b16 %v271
  %v304 = vunpack.c.l.b16 %v272
  %v305 = vunpack.c.l.b16 %v273
  %v306 = vunpack.c.l.b16 %v274
  %v307 = vpack.c.b16 %v292, %v291
  %v308 = vpack.c.b16 %v294, %v293
  %v309 = vpack.c.b16 %v296, %v295
  %v310 = vpack.c.b16 %v298, %v297
  %v311 = vpack.c.b16 %v300, %v299
  %v312 = vpack.c.b16 %v302, %v301
  %v313 = vpack.c.b16 %v304, %v303
  %v314 = vpack.c.b16 %v306, %v305
  %323 = vmatpush.bf16.msra.mxu0 %v314
  %324 = vmatpush.bf16.msra.mxu0 %v313
  %325 = vmatpush.bf16.msra.mxu0 %v312
  %326 = vmatpush.bf16.msra.mxu0 %v311
  %327 = vmatpush.bf16.msra.mxu0 %v310
  %328 = vmatpush.bf16.msra.mxu0 %v309
  %329 = vmatpush.bf16.msra.mxu0 %v308
  %330 = vmatpush.bf16.msra.mxu0 %v307
  %331 = vmatmul.bf16.gmra.mxu0 %v255
  %v332 = vpop.f32.mrf.mxu0
  %v333 = vadd.f32 0.0, %v332
  %v334 = vpop.f32.mrf.mxu0
  %v335 = vadd.f32 0.0, %v334
  %336 = vmatmul.bf16.gmra.mxu0 %v256
  %v337 = vpop.f32.mrf.mxu0
  %v338 = vadd.f32 0.0, %v337
  %v339 = vpop.f32.mrf.mxu0
  %v340 = vadd.f32 0.0, %v339
  %341 = vmatmul.bf16.gmra.mxu0 %v257
  %v342 = vpop.f32.mrf.mxu0
  %v343 = vadd.f32 0.0, %v342
  %v344 = vpop.f32.mrf.mxu0
  %v345 = vadd.f32 0.0, %v344
  %346 = vmatmul.bf16.gmra.mxu0 %v258
  %v347 = vpop.f32.mrf.mxu0
  %v348 = vadd.f32 0.0, %v347
  %v349 = vpop.f32.mrf.mxu0
  %v350 = vadd.f32 0.0, %v349
  %351 = vdwg.mxu0
  %v352 = vld [vmem:[%s7] sm:$0xf]
  %v353 = vld [vmem:[%s7 + $0x4] sm:$0xf]
  %v354 = vld [vmem:[%s7 + $0x8] sm:$0xf]
  %v355 = vld [vmem:[%s7 + $0xc] sm:$0xf]
  %v356 = vld [vmem:[%s7 + $0x10] sm:$0xf]
  %v357 = vld [vmem:[%s7 + $0x14] sm:$0xf]
  %v358 = vld [vmem:[%s7 + $0x18] sm:$0xf]
  %v359 = vld [vmem:[%s7 + $0x1c] sm:$0xf]
  %v360 = vld [vmem:[%s7 + $0x20] sm:$0xf]
  %v361 = vld [vmem:[%s7 + $0x24] sm:$0xf]
  %v362 = vld [vmem:[%s7 + $0x28] sm:$0xf]
  %v363 = vld [vmem:[%s7 + $0x2c] sm:$0xf]
  %v364 = vld [vmem:[%s7 + $0x30] sm:$0xf]
  %v365 = vld [vmem:[%s7 + $0x34] sm:$0xf]
  %v366 = vld [vmem:[%s7 + $0x38] sm:$0xf]
  %v367 = vld [vmem:[%s7 + $0x3c] sm:$0xf]
  %v384 = vunpack.c.l.b16 %v352
  %v385 = vunpack.c.l.b16 %v353
  %v386 = vunpack.c.l.b16 %v354
  %v387 = vunpack.c.l.b16 %v355
  %v388 = vunpack.c.l.b16 %v356
  %v389 = vunpack.c.l.b16 %v357
  %v390 = vunpack.c.l.b16 %v358
  %v391 = vunpack.c.l.b16 %v359
  %v392 = vunpack.c.l.b16 %v360
  %v393 = vunpack.c.l.b16 %v361
  %v394 = vunpack.c.l.b16 %v362
  %v395 = vunpack.c.l.b16 %v363
  %v396 = vunpack.c.l.b16 %v364
  %v397 = vunpack.c.l.b16 %v365
  %v398 = vunpack.c.l.b16 %v366
  %v399 = vunpack.c.l.b16 %v367
  %v400 = vpack.c.b16 %v385, %v384
  %v401 = vpack.c.b16 %v387, %v386
  %v402 = vpack.c.b16 %v389, %v388
  %v403 = vpack.c.b16 %v391, %v390
  %v404 = vpack.c.b16 %v393, %v392
  %v405 = vpack.c.b16 %v395, %v394
  %v406 = vpack.c.b16 %v397, %v396
  %v407 = vpack.c.b16 %v399, %v398
  %416 = vmatpush.bf16.msra.mxu0 %v407
  %417 = vmatpush.bf16.msra.mxu0 %v406
  %418 = vmatpush.bf16.msra.mxu0 %v405
  %419 = vmatpush.bf16.msra.mxu0 %v404
  %420 = vmatpush.bf16.msra.mxu0 %v403
  %421 = vmatpush.bf16.msra.mxu0 %v402
  %422 = vmatpush.bf16.msra.mxu0 %v401
  %423 = vmatpush.bf16.msra.mxu0 %v400
  %424 = vmatmul.bf16.gmra.mxu0 %v255
  %v425 = vpop.f32.mrf.mxu0
  %v426 = vadd.f32 0.0, %v425
  %v427 = vpop.f32.mrf.mxu0
  %v428 = vadd.f32 0.0, %v427
  %429 = vmatmul.bf16.gmra.mxu0 %v256
  %v430 = vpop.f32.mrf.mxu0
  %v431 = vadd.f32 0.0, %v430
  %v432 = vpop.f32.mrf.mxu0
  %v433 = vadd.f32 0.0, %v432
  %434 = vmatmul.bf16.gmra.mxu0 %v257
  %v435 = vpop.f32.mrf.mxu0
  %v436 = vadd.f32 0.0, %v435
  %v437 = vpop.f32.mrf.mxu0
  %v438 = vadd.f32 0.0, %v437
  %439 = vmatmul.bf16.gmra.mxu0 %v258
  %v440 = vpop.f32.mrf.mxu0
  %v441 = vadd.f32 0.0, %v440
  %v442 = vpop.f32.mrf.mxu0
  %v443 = vadd.f32 0.0, %v442
  %444 = vdwg.mxu0
  %v445 = vpack.c.bf16 %v335, %v333
  %v446 = vpack.c.bf16 %v340, %v338
  %v447 = vpack.c.bf16 %v345, %v343
  %v448 = vpack.c.bf16 %v350, %v348
  %v449 = vpack.c.bf16 %v428, %v426
  %v450 = vpack.c.bf16 %v433, %v431
  %v451 = vpack.c.bf16 %v438, %v436
  %v452 = vpack.c.bf16 %v443, %v441
  %v453 = vld [vmem:[%s4] sm:$0xff]
  %v454 = vld [vmem:[%s4 + $0x8] sm:$0xff]
  %v455 = vld [vmem:[%s4 + $0x10] sm:$0xff]
  %v456 = vld [vmem:[%s4 + $0x18] sm:$0xff]
  %v457 = vld [vmem:[%s4 + $0x20] sm:$0xff]
  %v458 = vld [vmem:[%s4 + $0x28] sm:$0xff]
  %v459 = vld [vmem:[%s4 + $0x30] sm:$0xff]
  %v460 = vld [vmem:[%s4 + $0x38] sm:$0xff]
  %v461 = vld [vmem:[%s4 + $0x40] sm:$0xff]
  %v462 = vld [vmem:[%s4 + $0x48] sm:$0xff]
  %v463 = vld [vmem:[%s4 + $0x50] sm:$0xff]
  %v464 = vld [vmem:[%s4 + $0x58] sm:$0xff]
  %v465 = vld [vmem:[%s4 + $0x60] sm:$0xff]
  %v466 = vld [vmem:[%s4 + $0x68] sm:$0xff]
  %v467 = vld [vmem:[%s4 + $0x70] sm:$0xff]
  %v468 = vld [vmem:[%s4 + $0x78] sm:$0xff]
  %v485 = vunpack.c.l.b16 %v453
  %v486 = vunpack.c.h.b16 %v453
  %v487 = vunpack.c.l.b16 %v454
  %v488 = vunpack.c.h.b16 %v454
  %v489 = vunpack.c.l.b16 %v455
  %v490 = vunpack.c.h.b16 %v455
  %v491 = vunpack.c.l.b16 %v456
  %v492 = vunpack.c.h.b16 %v456
  %v493 = vunpack.c.l.b16 %v457
  %v494 = vunpack.c.h.b16 %v457
  %v495 = vunpack.c.l.b16 %v458
  %v496 = vunpack.c.h.b16 %v458
  %v497 = vunpack.c.l.b16 %v459
  %v498 = vunpack.c.h.b16 %v459
  %v499 = vunpack.c.l.b16 %v460
  %v500 = vunpack.c.h.b16 %v460
  %v501 = vunpack.c.l.b16 %v461
  %v502 = vunpack.c.h.b16 %v461
  %v503 = vunpack.c.l.b16 %v462
  %v504 = vunpack.c.h.b16 %v462
  %v505 = vunpack.c.l.b16 %v463
  %v506 = vunpack.c.h.b16 %v463
  %v507 = vunpack.c.l.b16 %v464
  %v508 = vunpack.c.h.b16 %v464
  %v509 = vunpack.c.l.b16 %v465
  %v510 = vunpack.c.h.b16 %v465
  %v511 = vunpack.c.l.b16 %v466
  %v512 = vunpack.c.h.b16 %v466
  %v513 = vunpack.c.l.b16 %v467
  %v514 = vunpack.c.h.b16 %v467
  %v515 = vunpack.c.l.b16 %v468
  %v516 = vunpack.c.h.b16 %v468
  %v517 = vpack.c.b16 %v487, %v485
  %v518 = vpack.c.b16 %v488, %v486
  %v519 = vpack.c.b16 %v491, %v489
  %v520 = vpack.c.b16 %v492, %v490
  %v521 = vpack.c.b16 %v495, %v493
  %v522 = vpack.c.b16 %v496, %v494
  %v523 = vpack.c.b16 %v499, %v497
  %v524 = vpack.c.b16 %v500, %v498
  %v525 = vpack.c.b16 %v503, %v501
  %v526 = vpack.c.b16 %v504, %v502
  %v527 = vpack.c.b16 %v507, %v505
  %v528 = vpack.c.b16 %v508, %v506
  %v529 = vpack.c.b16 %v511, %v509
  %v530 = vpack.c.b16 %v512, %v510
  %v531 = vpack.c.b16 %v515, %v513
  %v532 = vpack.c.b16 %v516, %v514
  %vm541 = vcmask 64512
  %v543 = vsel %vm541, %v518, 0
  %v546 = vsel %vm541, %v520, 0
  %v549 = vsel %vm541, %v522, 0
  %v552 = vsel %vm541, %v524, 0
  %v555 = vsel %vm541, %v526, 0
  %v558 = vsel %vm541, %v528, 0
  %v561 = vsel %vm541, %v530, 0
  %v564 = vsel %vm541, %v532, 0
  %566 = vmatpush.bf16.msra.mxu0 %v452
  %567 = vmatpush.bf16.msra.mxu0 %v451
  %568 = vmatpush.bf16.msra.mxu0 %v450
  %569 = vmatpush.bf16.msra.mxu0 %v449
  %570 = vmatpush.bf16.msra.mxu0 %v448
  %571 = vmatpush.bf16.msra.mxu0 %v447
  %572 = vmatpush.bf16.msra.mxu0 %v446
  %573 = vmatpush.bf16.msra.mxu0 %v445
  %574 = vmatmul.bf16.gmra.mxu0 %v517
  %v575 = vpop.f32.mrf.mxu0
  %v576 = vadd.f32 0.0, %v575
  %v577 = vpop.f32.mrf.mxu0
  %v578 = vadd.f32 0.0, %v577
  %579 = vmatmul.bf16.gmra.mxu0 %v519
  %v580 = vpop.f32.mrf.mxu0
  %v581 = vadd.f32 0.0, %v580
  %v582 = vpop.f32.mrf.mxu0
  %v583 = vadd.f32 0.0, %v582
  %584 = vmatmul.bf16.gmra.mxu0 %v521
  %v585 = vpop.f32.mrf.mxu0
  %v586 = vadd.f32 0.0, %v585
  %v587 = vpop.f32.mrf.mxu0
  %v588 = vadd.f32 0.0, %v587
  %589 = vmatmul.bf16.gmra.mxu0 %v523
  %v590 = vpop.f32.mrf.mxu0
  %v591 = vadd.f32 0.0, %v590
  %v592 = vpop.f32.mrf.mxu0
  %v593 = vadd.f32 0.0, %v592
  %594 = vmatmul.bf16.gmra.mxu0 %v525
  %v595 = vpop.f32.mrf.mxu0
  %v596 = vadd.f32 0.0, %v595
  %v597 = vpop.f32.mrf.mxu0
  %v598 = vadd.f32 0.0, %v597
  %599 = vmatmul.bf16.gmra.mxu0 %v527
  %v600 = vpop.f32.mrf.mxu0
  %v601 = vadd.f32 0.0, %v600
  %v602 = vpop.f32.mrf.mxu0
  %v603 = vadd.f32 0.0, %v602
  %604 = vmatmul.bf16.gmra.mxu0 %v529
  %v605 = vpop.f32.mrf.mxu0
  %v606 = vadd.f32 0.0, %v605
  %v607 = vpop.f32.mrf.mxu0
  %v608 = vadd.f32 0.0, %v607
  %609 = vmatmul.bf16.gmra.mxu0 %v531
  %v610 = vpop.f32.mrf.mxu0
  %v611 = vadd.f32 0.0, %v610
  %v612 = vpop.f32.mrf.mxu0
  %v613 = vadd.f32 0.0, %v612
  %614 = vdwg.mxu0
  %615 = vmatpush.bf16.msra.mxu0 0
  %616 = vmatpush.bf16.msra.mxu0 0
  %617 = vmatpush.bf16.msra.mxu0 0
  %618 = vmatpush.bf16.msra.mxu0 0
  %619 = vmatpush.bf16.msra.mxu0 0
  %620 = vmatpush.bf16.msra.mxu0 0
  %621 = vmatpush.bf16.msra.mxu0 0
  %622 = vmatpush.bf16.msra.mxu0 %v75
  %623 = vmatmul.bf16.gmra.mxu0 %v543
  %v624 = vpop.f32.mrf.mxu0
  %v625 = vadd.f32 %v576, %v624
  %v626 = vpop.f32.mrf.mxu0
  %v627 = vadd.f32 %v578, %v626
  %628 = vmatmul.bf16.gmra.mxu0 %v546
  %v629 = vpop.f32.mrf.mxu0
  %v630 = vadd.f32 %v581, %v629
  %v631 = vpop.f32.mrf.mxu0
  %v632 = vadd.f32 %v583, %v631
  %633 = vmatmul.bf16.gmra.mxu0 %v549
  %v634 = vpop.f32.mrf.mxu0
  %v635 = vadd.f32 %v586, %v634
  %v636 = vpop.f32.mrf.mxu0
  %v637 = vadd.f32 %v588, %v636
  %638 = vmatmul.bf16.gmra.mxu0 %v552
  %v639 = vpop.f32.mrf.mxu0
  %v640 = vadd.f32 %v591, %v639
  %v641 = vpop.f32.mrf.mxu0
  %v642 = vadd.f32 %v593, %v641
  %643 = vmatmul.bf16.gmra.mxu0 %v555
  %v644 = vpop.f32.mrf.mxu0
  %v645 = vadd.f32 %v596, %v644
  %v646 = vpop.f32.mrf.mxu0
  %v647 = vadd.f32 %v598, %v646
  %648 = vmatmul.bf16.gmra.mxu0 %v558
  %v649 = vpop.f32.mrf.mxu0
  %v650 = vadd.f32 %v601, %v649
  %v651 = vpop.f32.mrf.mxu0
  %v652 = vadd.f32 %v603, %v651
  %653 = vmatmul.bf16.gmra.mxu0 %v561
  %v654 = vpop.f32.mrf.mxu0
  %v655 = vadd.f32 %v606, %v654
  %v656 = vpop.f32.mrf.mxu0
  %v657 = vadd.f32 %v608, %v656
  %658 = vmatmul.bf16.gmra.mxu0 %v564
  %v659 = vpop.f32.mrf.mxu0
  %v660 = vadd.f32 %v611, %v659
  %v661 = vpop.f32.mrf.mxu0
  %v662 = vadd.f32 %v613, %v661
  %663 = vdwg.mxu0
  %v664 = vmul.f32 %v625, 0.1
  %v665 = vmul.f32 %v627, 0.1
  %v666 = vmul.f32 %v630, 0.1
  %v667 = vmul.f32 %v632, 0.1
  %v668 = vmul.f32 %v635, 0.1
  %v669 = vmul.f32 %v637, 0.1
  %v670 = vmul.f32 %v640, 0.1
  %v671 = vmul.f32 %v642, 0.1
  %v672 = vmul.f32 %v645, 0.1
  %v673 = vmul.f32 %v647, 0.1
  %v674 = vmul.f32 %v650, 0.1
  %v675 = vmul.f32 %v652, 0.1
  %v676 = vmul.f32 %v655, 0.1
  %v677 = vmul.f32 %v657, 0.1
  %v678 = vmul.f32 %v660, 0.1
  %v679 = vmul.f32 %v662, 0.1
  %v680 = vmax.f32 %v625, %v664
  %v681 = vmax.f32 %v627, %v665
  %v682 = vmax.f32 %v630, %v666
  %v683 = vmax.f32 %v632, %v667
  %v684 = vmax.f32 %v635, %v668
  %v685 = vmax.f32 %v637, %v669
  %v686 = vmax.f32 %v640, %v670
  %v687 = vmax.f32 %v642, %v671
  %v688 = vmax.f32 %v645, %v672
  %v689 = vmax.f32 %v647, %v673
  %v690 = vmax.f32 %v650, %v674
  %v691 = vmax.f32 %v652, %v675
  %v692 = vmax.f32 %v655, %v676
  %v693 = vmax.f32 %v657, %v677
  %v694 = vmax.f32 %v660, %v678
  %v695 = vmax.f32 %v662, %v679
  %v696 = vpack.c.bf16 %v681, %v680
  %v697 = vpack.c.bf16 %v683, %v682
  %v698 = vpack.c.bf16 %v685, %v684
  %v699 = vpack.c.bf16 %v687, %v686
  %v700 = vpack.c.bf16 %v689, %v688
  %v701 = vpack.c.bf16 %v691, %v690
  %v702 = vpack.c.bf16 %v693, %v692
  %v703 = vpack.c.bf16 %v695, %v694
  %v704 = vld [vmem:[%s8] sm:$0xf]
  %v706 = vsel %vm541, %v696, 0
  %v709 = vsel %vm541, %v697, 0
  %v712 = vsel %vm541, %v698, 0
  %v715 = vsel %vm541, %v699, 0
  %v718 = vsel %vm541, %v700, 0
  %v721 = vsel %vm541, %v701, 0
  %v724 = vsel %vm541, %v702, 0
  %v727 = vsel %vm541, %v703, 0
  %v730 = vsel %vm73, %v704, 0
  %732 = vmatpush.bf16.msra.mxu0 0
  %733 = vmatpush.bf16.msra.mxu0 0
  %734 = vmatpush.bf16.msra.mxu0 0
  %735 = vmatpush.bf16.msra.mxu0 0
  %736 = vmatpush.bf16.msra.mxu0 0
  %737 = vmatpush.bf16.msra.mxu0 0
  %738 = vmatpush.bf16.msra.mxu0 0
  %739 = vmatpush.bf16.msra.mxu0 %v730
  %740 = vmatmul.bf16.gmra.mxu0 %v706
  %v741 = vpop.f32.mrf.mxu0
  %v742 = vadd.f32 0.0, %v741
  %v743 = vpop.f32.mrf.mxu0
  %v744 = vadd.f32 0.0, %v743
  %745 = vmatmul.bf16.gmra.mxu0 %v709
  %v746 = vpop.f32.mrf.mxu0
  %v747 = vadd.f32 0.0, %v746
  %v748 = vpop.f32.mrf.mxu0
  %v749 = vadd.f32 0.0, %v748
  %750 = vmatmul.bf16.gmra.mxu0 %v712
  %v751 = vpop.f32.mrf.mxu0
  %v752 = vadd.f32 0.0, %v751
  %v753 = vpop.f32.mrf.mxu0
  %v754 = vadd.f32 0.0, %v753
  %755 = vmatmul.bf16.gmra.mxu0 %v715
  %v756 = vpop.f32.mrf.mxu0
  %v757 = vadd.f32 0.0, %v756
  %v758 = vpop.f32.mrf.mxu0
  %v759 = vadd.f32 0.0, %v758
  %760 = vmatmul.bf16.gmra.mxu0 %v718
  %v761 = vpop.f32.mrf.mxu0
  %v762 = vadd.f32 0.0, %v761
  %v763 = vpop.f32.mrf.mxu0
  %v764 = vadd.f32 0.0, %v763
  %765 = vmatmul.bf16.gmra.mxu0 %v721
  %v766 = vpop.f32.mrf.mxu0
  %v767 = vadd.f32 0.0, %v766
  %v768 = vpop.f32.mrf.mxu0
  %v769 = vadd.f32 0.0, %v768
  %770 = vmatmul.bf16.gmra.mxu0 %v724
  %v771 = vpop.f32.mrf.mxu0
  %v772 = vadd.f32 0.0, %v771
  %v773 = vpop.f32.mrf.mxu0
  %v774 = vadd.f32 0.0, %v773
  %775 = vmatmul.bf16.gmra.mxu0 %v727
  %v776 = vpop.f32.mrf.mxu0
  %v777 = vadd.f32 0.0, %v776
  %v778 = vpop.f32.mrf.mxu0
  %v779 = vadd.f32 0.0, %v778
  %780 = vdwg.mxu0
  %v781 = vld [vmem:[%s9] sm:$0xf]
  %v783 = vsel %vm73, %v781, 0
  %785 = vmatpush.bf16.msra.mxu0 0
  %786 = vmatpush.bf16.msra.mxu0 0
  %787 = vmatpush.bf16.msra.mxu0 0
  %788 = vmatpush.bf16.msra.mxu0 0
  %789 = vmatpush.bf16.msra.mxu0 0
  %790 = vmatpush.bf16.msra.mxu0 0
  %791 = vmatpush.bf16.msra.mxu0 0
  %792 = vmatpush.bf16.msra.mxu0 %v783
  %793 = vmatmul.bf16.gmra.mxu0 %v706
  %v794 = vpop.f32.mrf.mxu0
  %v795 = vadd.f32 0.0, %v794
  %v796 = vpop.f32.mrf.mxu0
  %v797 = vadd.f32 0.0, %v796
  %798 = vmatmul.bf16.gmra.mxu0 %v709
  %v799 = vpop.f32.mrf.mxu0
  %v800 = vadd.f32 0.0, %v799
  %v801 = vpop.f32.mrf.mxu0
  %v802 = vadd.f32 0.0, %v801
  %803 = vmatmul.bf16.gmra.mxu0 %v712
  %v804 = vpop.f32.mrf.mxu0
  %v805 = vadd.f32 0.0, %v804
  %v806 = vpop.f32.mrf.mxu0
  %v807 = vadd.f32 0.0, %v806
  %808 = vmatmul.bf16.gmra.mxu0 %v715
  %v809 = vpop.f32.mrf.mxu0
  %v810 = vadd.f32 0.0, %v809
  %v811 = vpop.f32.mrf.mxu0
  %v812 = vadd.f32 0.0, %v811
  %813 = vmatmul.bf16.gmra.mxu0 %v718
  %v814 = vpop.f32.mrf.mxu0
  %v815 = vadd.f32 0.0, %v814
  %v816 = vpop.f32.mrf.mxu0
  %v817 = vadd.f32 0.0, %v816
  %818 = vmatmul.bf16.gmra.mxu0 %v721
  %v819 = vpop.f32.mrf.mxu0
  %v820 = vadd.f32 0.0, %v819
  %v821 = vpop.f32.mrf.mxu0
  %v822 = vadd.f32 0.0, %v821
  %823 = vmatmul.bf16.gmra.mxu0 %v724
  %v824 = vpop.f32.mrf.mxu0
  %v825 = vadd.f32 0.0, %v824
  %v826 = vpop.f32.mrf.mxu0
  %v827 = vadd.f32 0.0, %v826
  %828 = vmatmul.bf16.gmra.mxu0 %v727
  %v829 = vpop.f32.mrf.mxu0
  %v830 = vadd.f32 0.0, %v829
  %v831 = vpop.f32.mrf.mxu0
  %v832 = vadd.f32 0.0, %v831
  %833 = vdwg.mxu0
  %v834 = vpack.c.bf16 %v744, %v742
  %v835 = vpack.c.bf16 %v749, %v747
  %v836 = vpack.c.bf16 %v754, %v752
  %v837 = vpack.c.bf16 %v759, %v757
  %v838 = vpack.c.bf16 %v764, %v762
  %v839 = vpack.c.bf16 %v769, %v767
  %v840 = vpack.c.bf16 %v774, %v772
  %v841 = vpack.c.bf16 %v779, %v777
  %v842 = vpack.c.bf16 %v797, %v795
  %v843 = vpack.c.bf16 %v802, %v800
  %v844 = vpack.c.bf16 %v807, %v805
  %v845 = vpack.c.bf16 %v812, %v810
  %v846 = vpack.c.bf16 %v817, %v815
  %v847 = vpack.c.bf16 %v822, %v820
  %v848 = vpack.c.bf16 %v827, %v825
  %v849 = vpack.c.bf16 %v832, %v830
  %v850 = vld [vmem:[%s5] sm:$0xff]
  %v851 = vld [vmem:[%s5 + $0x8] sm:$0xf]
  %v852 = vld [vmem:[%s5 + $0xc] sm:$0xff]
  %v853 = vld [vmem:[%s5 + $0x14] sm:$0xf]
  %v858 = vunpack.c.l.b16 %v850
  %v859 = vunpack.c.h.b16 %v850
  %v860 = vunpack.c.l.b16 %v851
  %v861 = vunpack.c.l.b16 %v852
  %v862 = vunpack.c.h.b16 %v852
  %v863 = vunpack.c.l.b16 %v853
  %v864 = vpack.c.b16 %v861, %v858
  %v865 = vpack.c.b16 %v862, %v859
  %v866 = vpack.c.b16 %v863, %v860
  %v870 = vsel %vm541, %v866, 0
  %872 = vmatpush.bf16.msra.mxu0 %v841
  %873 = vmatpush.bf16.msra.mxu0 %v840
  %874 = vmatpush.bf16.msra.mxu0 %v839
  %875 = vmatpush.bf16.msra.mxu0 %v838
  %876 = vmatpush.bf16.msra.mxu0 %v837
  %877 = vmatpush.bf16.msra.mxu0 %v836
  %878 = vmatpush.bf16.msra.mxu0 %v835
  %879 = vmatpush.bf16.msra.mxu0 %v834
  %880 = vmatmul.bf16.gmra.mxu0 %v864
  %v881 = vpop.f32.mrf.mxu0
  %v882 = vadd.f32 0.0, %v881
  %v883 = vpop.f32.mrf.mxu0
  %v884 = vadd.f32 0.0, %v883
  %885 = vdwg.mxu0
  %886 = vmatpush.bf16.msra.mxu0 %v849
  %887 = vmatpush.bf16.msra.mxu0 %v848
  %888 = vmatpush.bf16.msra.mxu0 %v847
  %889 = vmatpush.bf16.msra.mxu0 %v846
  %890 = vmatpush.bf16.msra.mxu0 %v845
  %891 = vmatpush.bf16.msra.mxu0 %v844
  %892 = vmatpush.bf16.msra.mxu0 %v843
  %893 = vmatpush.bf16.msra.mxu0 %v842
  %894 = vmatmul.bf16.gmra.mxu0 %v865
  %v895 = vpop.f32.mrf.mxu0
  %v896 = vadd.f32 %v882, %v895
  %v897 = vpop.f32.mrf.mxu0
  %v898 = vadd.f32 %v884, %v897
  %899 = vdwg.mxu0
  %900 = vmatpush.bf16.msra.mxu0 0
  %901 = vmatpush.bf16.msra.mxu0 0
  %902 = vmatpush.bf16.msra.mxu0 0
  %903 = vmatpush.bf16.msra.mxu0 0
  %904 = vmatpush.bf16.msra.mxu0 0
  %905 = vmatpush.bf16.msra.mxu0 0
  %906 = vmatpush.bf16.msra.mxu0 0
  %907 = vmatpush.bf16.msra.mxu0 %v75
  %908 = vmatmul.bf16.gmra.mxu0 %v870
  %v909 = vpop.f32.mrf.mxu0
  %v910 = vadd.f32 %v896, %v909
  %v911 = vpop.f32.mrf.mxu0
  %v912 = vadd.f32 %v898, %v911
  %913 = vdwg.mxu0
  %v914 = vmul.f32 %v910, 0.1
  %v915 = vmul.f32 %v912, 0.1
  %v916 = vmax.f32 %v910, %v914
  %v917 = vmax.f32 %v912, %v915
  %vm918 = vcmask 31744
  %919 = vst.msk [vmem:[%s10] sm:$0xff] %vm918, %v916
  %920 = vst.msk [vmem:[%s10 + $0x8] sm:$0xff] %vm918, %v917
  // Predicated region
  $region42: #{tpu_custom_call.1} parent=0 // pred_check
    _
  $region43: #{tpu_custom_call.1} parent=0 // pred_check_branch
    %922 = sbr.rel (0) target = $region45
  $region44: #{tpu_custom_call.1} parent=0 // pred_region
    _
  $region45: #{tpu_custom_call.1} parent=0 // pred_fallthru
    _
  // Predicated region
  $region46: #{tpu_custom_call.1} parent=0 // pred_check
    _
  $region47: #{tpu_custom_call.1} parent=0 // pred_check_branch
    %924 = sbr.rel (0) target = $region49
  $region48: #{tpu_custom_call.1} parent=0 // pred_region
    _
  $region49: #{tpu_custom_call.1} parent=0 // pred_fallthru
    _

</llo_original>
